<compile_context>
chip_gen: v7x
topology: tpu7x:2x2x1
jax: 0.10.0
libtpu: 0.0.40
codegen_flags: <defaults>
</compile_context>

<pallas_src>
import functools

import jax
import jax.numpy as jnp
from jax.experimental import pallas as pl
from jax.experimental.pallas import tpu as pltpu

# ---- "opt" flags from parse_arguments() (values chosen; see module) ----
SHARE_DBFE = True        # all maps share pool/MLP index 0
OUTPUT_L2 = True         # L2-normalize each per-map vector
FINAL_L2 = True          # L2-normalize the per-sample mean

GEM_P = 3.0              # GeM default p (static -> cube on the VPU, no EUP pow)
GEM_EPS = 1e-6           # GeM clamp eps
LN_EPS = 1e-5            # torch.nn.LayerNorm default
NORM_EPS = 1e-12         # F.normalize eps (norm clamp, matched exactly below)

# HBM-read-bound kernel: feed the image tensor as bf16 (halves DMA bytes) and
# upcast to f32 in-kernel before any arithmetic.  Use jnp.float32 for exact
# parity with an f32 PyTorch reference.
INPUT_DTYPE = jnp.bfloat16


# ------------------------------ kernel helpers ------------------------------
def _l2_normalize(v, eps):
    # torch F.normalize parity: v / max(||v||_2, eps)
    nrm = jnp.sqrt(jnp.sum(v * v, axis=-1, keepdims=True))
    return v / jnp.maximum(nrm, eps)


def _db_fused_kernel(x_ref, w1_ref, b1_ref, g_ref, be_ref, w2_ref, b2_ref,
                     o_ref, acc_ref, *, nmap, n_chan, spatial, spatial_pad,
                     gem_p, gem_eps, ln_eps, norm_eps, output_l2, final_l2):
    """One (sample-tile, map) grid step: GeM + Linear + LayerNorm + ReLU +
    Linear (+ per-map L2), accumulated over the inner map axis."""
    m = pl.program_id(1)
    tile_bn = o_ref.shape[0]
    dim = w2_ref.shape[1]

    @pl.when(m == 0)
    def _():
        acc_ref[...] = jnp.zeros_like(acc_ref)

    # ---- GeM pooling (p = 3), streamed per channel (no block-sized temps),
    # fused with the K = n_chan first Linear as broadcast FMAs on the VPU.
    h = jnp.broadcast_to(b1_ref[...], (tile_bn, dim))
    inv_spatial = 1.0 / float(spatial)              # TRUE h*w, not padded
    for ci in range(n_chan):                        # static, C == 3
        xi = x_ref[0, :, ci * spatial_pad:(ci + 1) * spatial_pad]
        xi = jnp.maximum(xi.astype(jnp.float32), gem_eps)
        xc = xi * xi * xi                           # x**p with p == 3
        m_c = jnp.sum(xc, axis=-1, keepdims=True) * inv_spatial
        pooled_c = jnp.exp(jnp.log(m_c) * (1.0 / gem_p))   # mean**(1/p), EUP
        h = h + pooled_c * w1_ref[ci:ci + 1, :]

    # ---- LayerNorm + ReLU
    mu = jnp.mean(h, axis=-1, keepdims=True)
    d = h - mu
    var = jnp.mean(d * d, axis=-1, keepdims=True)
    hr = jnp.maximum(
        d * jax.lax.rsqrt(var + ln_eps) * g_ref[...] + be_ref[...], 0.0)

    # ---- second Linear (MXU)
    vecs = jnp.dot(hr, w2_ref[...], preferred_element_type=jnp.float32)
    vecs = vecs + b2_ref[...]

    if output_l2:
        vecs = _l2_normalize(vecs, norm_eps)

    acc_ref[...] += vecs

    @pl.when(m == nmap - 1)
    def _():
        out = acc_ref[...] * (1.0 / nmap)           # mean over maps
        if final_l2:
            out = _l2_normalize(out, norm_eps)
        o_ref[...] = out


# --------------------------- tiling / VMEM sizing ---------------------------
_TILE_CANDIDATES = (2048, 1024, 512, 256, 128, 64, 32, 16, 8)


def _vmem_capacity_bytes():
    try:
        return int(pltpu.get_tpu_info().vmem_capacity_bytes)
    except Exception:                    # fall back to the smallest (v7x) VMEM
        return 64 * 1024 * 1024


def _estimate_vmem(t, lanes_pad, spatial_pad, dim, in_itemsize):
    """Rough peak VMEM for a sample tile of t rows (double-buffered input +
    streamed per-channel temps + MLP temps + resident weights + margin)."""
    dim_p = max(dim, 128)
    in_blk = 2 * t * lanes_pad * in_itemsize
    chan_tmp = 3 * t * spatial_pad * 4
    mlp_tmp = 10 * t * dim_p * 4
    out_blk = 2 * t * dim_p * 4
    weights = 4 * (16 * dim_p + dim * dim_p) * 4
    return in_blk + chan_tmp + mlp_tmp + out_blk + weights + (2 << 20)


def _pick_tile_bn(bn_pad, lanes_pad, spatial_pad, dim, in_itemsize, budget,
                  min_tile):
    """Largest sample tile that divides bn_pad, keeps >= 2 steps on the
    parallel grid axis (both v7x TensorCores busy) and fits the VMEM budget."""
    for t in _TILE_CANDIDATES:
        if t % min_tile or bn_pad % t or bn_pad // t < 2:
            continue
        if _estimate_vmem(t, lanes_pad, spatial_pad, dim, in_itemsize) <= budget:
            return t
    return min_tile


# ------------------------- fused forward_db wrapper -------------------------
def _fused_forward(x3, params, *, nmap, n_chan, spatial, spatial_pad):
    """x3: (nmap, bn_pad, n_chan*spatial_pad) -> (bn_pad, dim) f32."""
    w1p, b1, g, be, w2, b2 = params
    nm, bn_pad, lanes_pad = x3.shape
    assert nm == nmap
    dim = w2.shape[1]
    in_itemsize = jnp.dtype(x3.dtype).itemsize

    vmem_cap = _vmem_capacity_bytes()
    min_tile = 16 if in_itemsize < 4 else 8
    tile_bn = _pick_tile_bn(bn_pad, lanes_pad, spatial_pad, dim, in_itemsize,
                            int(vmem_cap * 0.65), min_tile)
    grid = (bn_pad // tile_bn, nmap)         # maps = inner accumulation axis

    kernel = functools.partial(
        _db_fused_kernel, nmap=nmap, n_chan=n_chan, spatial=spatial,
        spatial_pad=spatial_pad, gem_p=GEM_P, gem_eps=GEM_EPS, ln_eps=LN_EPS,
        norm_eps=NORM_EPS, output_l2=OUTPUT_L2, final_l2=FINAL_L2)

    rows = bn_pad * nmap
    cost = pl.CostEstimate(
        flops=int(rows * (4 * lanes_pad + 2 * dim * dim + 12 * dim)),
        transcendentals=int(rows * (2 * n_chan + 4)),
        bytes_accessed=int(rows * lanes_pad * in_itemsize + bn_pad * dim * 4
                           + (w1p.size + 4 * dim + w2.size) * 4))

    return pl.pallas_call(
        kernel,
        grid=grid,
        in_specs=[
            pl.BlockSpec((1, tile_bn, lanes_pad), lambda j, m: (m, j, 0)),
            pl.BlockSpec(w1p.shape, lambda j, m: (0, 0)),
            pl.BlockSpec((1, dim), lambda j, m: (0, 0)),
            pl.BlockSpec((1, dim), lambda j, m: (0, 0)),
            pl.BlockSpec((1, dim), lambda j, m: (0, 0)),
            pl.BlockSpec((dim, dim), lambda j, m: (0, 0)),
            pl.BlockSpec((1, dim), lambda j, m: (0, 0)),
        ],
        out_specs=pl.BlockSpec((tile_bn, dim), lambda j, m: (j, 0)),
        out_shape=jax.ShapeDtypeStruct((bn_pad, dim), jnp.float32),
        scratch_shapes=[pltpu.VMEM((tile_bn, dim), jnp.float32)],
        compiler_params=pltpu.CompilerParams(
            dimension_semantics=("parallel", "arbitrary"),
            vmem_limit_bytes=int(vmem_cap * 0.85)),
        cost_estimate=cost,
    )(x3, w1p, b1, g, be, w2, b2)


# --------------------------- parameter creation ----------------------------
def init_mlp_params(key, d_in, d_out):
    """nn.Linear-style init (uniform +-1/sqrt(fan_in)); LayerNorm gamma=1,
    beta=0.  Biases/affine params kept 2-D (1, D) for lane-dense blocks."""
    k1, k2, k3, k4 = jax.random.split(key, 4)
    lim1 = 1.0 / jnp.sqrt(d_in)
    lim2 = 1.0 / jnp.sqrt(d_out)
    w1 = jax.random.uniform(k1, (d_in, d_out), jnp.float32, -lim1, lim1)
    b1 = jax.random.uniform(k2, (1, d_out), jnp.float32, -lim1, lim1)
    gamma = jnp.ones((1, d_out), jnp.float32)
    beta = jnp.zeros((1, d_out), jnp.float32)
    w2 = jax.random.uniform(k3, (d_out, d_out), jnp.float32, -lim2, lim2)
    b2 = jax.random.uniform(k4, (1, d_out), jnp.float32, -lim2, lim2)
    return (w1, b1, gamma, beta, w2, b2)


# ------------------------------ forward_db ---------------------------------
def forward_db(db_map, mlp_params):
    """db_map: (b, ndb, nmap, 3, h, w) ('train') or (b, nmap, 3, h, w)
    ('cachetest'). Returns {'embedding': ...} matching the PyTorch module."""
    if db_map.ndim == 5:
        mode = "cachetest"
        b, nmap, c, h, w = db_map.shape
        assert c == 3
        db_map = db_map[:, None]             # unsqueeze(1)
        ndb = 1
    elif db_map.ndim == 6:
        mode = "train"
        b, ndb, nmap, c, h, w = db_map.shape
        assert c == 3
    else:
        raise NotImplementedError

    # TODO(synk): real ImageFE backbone unspecified -> identity FE (last_dim=c).
    # SHARE_DBFE=True -> all maps share pool/MLP[0]; per-map weights would need
    # a scalar-prefetched weight index instead.
    w1, b1, g, be, w2, b2 = mlp_params[0]
    dim = w2.shape[1]

    spatial = h * w
    spatial_pad = ((spatial + 127) // 128) * 128   # 128-lane aligned channel runs
    bn = b * ndb
    in_itemsize = jnp.dtype(INPUT_DTYPE).itemsize
    min_tile = 16 if in_itemsize < 4 else 8
    bn_pad = max(-(-bn // min_tile) * min_tile, 2 * min_tile)  # >= 2 grid tiles

    # Map-major layout (nmap, bn_pad, c*spatial_pad): every grid step DMAs a
    # contiguous (tile_bn, lanes) slab.  Cast + transpose + pad fuse into one
    # XLA copy (and into the FE epilogue in a real model).  Zero-padded rows /
    # lanes are clamped to gem_eps in-kernel and sliced off below.
    x = db_map.reshape(bn, nmap, c, spatial)
    x = jnp.transpose(x, (1, 0, 2, 3))
    if spatial_pad != spatial or bn_pad != bn:
        x = jnp.pad(x, ((0, 0), (0, bn_pad - bn), (0, 0),
                        (0, spatial_pad - spatial)))
    x3 = x.reshape(nmap, bn_pad, c * spatial_pad).astype(INPUT_DTYPE)

    # Pad the (c, dim) first-layer weight to >= 8 sublane rows (extras unused).
    w1_rows = max(8, -(-c // 8) * 8)
    w1p = jnp.zeros((w1_rows, dim), jnp.float32).at[:c, :].set(
        w1.astype(jnp.float32))

    out = _fused_forward(x3, (w1p, b1, g, be, w2, b2), nmap=nmap, n_chan=c,
                         spatial=spatial, spatial_pad=spatial_pad)

    out = out[:bn].reshape(b, ndb, dim)
    if mode == "cachetest":
        assert ndb == 1
        out = out.reshape(b, dim)
    elif mode == "train":
        assert ndb > 1
    return {"embedding": out}


# --------------------------------- main -------------------------------------
if __name__ == "__main__":
    key = jax.random.PRNGKey(0)
    k_data, k_param = jax.random.split(key)

    # 'train' mode input: (b, ndb, nmap, c, h, w) with c == 3, ndb > 1
    b, ndb, nmap, c, h, w = 2, 2, 2, 3, 16, 16
    dim = 32
    db_map = jax.random.uniform(k_data, (b, ndb, nmap, c, h, w), jnp.float32)

    param_keys = jax.random.split(k_param, nmap)
    mlp_params = [init_mlp_params(param_keys[i], c, dim) for i in range(nmap)]

    fwd = jax.jit(forward_db)
    out = fwd(db_map, mlp_params)
    emb = jax.block_until_ready(out["embedding"])
    assert emb.shape == (b, ndb, dim)
    assert bool(jnp.all(jnp.isfinite(emb)))
    print("KERNEL_OK")
</pallas_src>

<mosaic_0001>
module attributes {stable_mosaic.version = 11 : i64} {
  func.func @_db_fused_kernel(%arg0: i32, %arg1: i32, %arg2: memref<1x16x768xbf16, #tpu.memory_space<vmem>>, %arg3: memref<8x32xf32, #tpu.memory_space<vmem>>, %arg4: memref<1x32xf32, #tpu.memory_space<vmem>>, %arg5: memref<1x32xf32, #tpu.memory_space<vmem>>, %arg6: memref<1x32xf32, #tpu.memory_space<vmem>>, %arg7: memref<32x32xf32, #tpu.memory_space<vmem>>, %arg8: memref<1x32xf32, #tpu.memory_space<vmem>>, %arg9: memref<16x32xf32, #tpu.memory_space<vmem>>, %arg10: memref<16x32xf32, #tpu.memory_space<vmem>>) attributes {dimension_semantics = [#tpu.dimension_semantics<parallel>, #tpu.dimension_semantics<arbitrary>], iteration_bounds = array<i64: 2, 2>, scalar_prefetch = 0 : i64, scratch_operands = 1 : i64, tpu.core_type = #tpu.core_type<tc>, window_params = [{transform_indices = @transform_0, window_bounds = array<i64: 1, 16, 768>}, {pipeline_mode = #tpu.pipeline_mode<synchronous>, transform_indices = @transform_1, window_bounds = array<i64: 8, 32>}, {pipeline_mode = #tpu.pipeline_mode<synchronous>, transform_indices = @transform_2, window_bounds = array<i64: 1, 32>}, {pipeline_mode = #tpu.pipeline_mode<synchronous>, transform_indices = @transform_3, window_bounds = array<i64: 1, 32>}, {pipeline_mode = #tpu.pipeline_mode<synchronous>, transform_indices = @transform_4, window_bounds = array<i64: 1, 32>}, {pipeline_mode = #tpu.pipeline_mode<synchronous>, transform_indices = @transform_5, window_bounds = array<i64: 32, 32>}, {pipeline_mode = #tpu.pipeline_mode<synchronous>, transform_indices = @transform_6, window_bounds = array<i64: 1, 32>}, {transform_indices = @transform_7, window_bounds = array<i64: 16, 32>}]} {
    %c0_i32 = arith.constant 0 : i32
    %0 = arith.cmpi eq, %arg1, %c0_i32 : i32
    %1 = arith.extui %0 : i1 to i32
    %c0_i32_0 = arith.constant 0 : i32
    %2 = arith.cmpi ne, %1, %c0_i32_0 : i32
    scf.if %2 {
      %cst_46 = arith.constant 0.000000e+00 : f32
      %109 = vector.broadcast %cst_46 : f32 to vector<16x32xf32>
      %c0_47 = arith.constant 0 : index
      %c0_48 = arith.constant 0 : index
      %110 = vector.load %arg10[%c0_47, %c0_48] : memref<16x32xf32, #tpu.memory_space<vmem>>, vector<16x32xf32>
      tpu.vector_store %arg10[%c0_47, %c0_48], %109 {strides = array<i32>} : memref<16x32xf32, #tpu.memory_space<vmem>>, vector<16x32xf32>,
    } else {
    }
    %c0 = arith.constant 0 : index
    %c0_1 = arith.constant 0 : index
    %3 = vector.load %arg4[%c0, %c0_1] : memref<1x32xf32, #tpu.memory_space<vmem>>, vector<1x32xf32>
    %4 = vector.shape_cast %3 : vector<1x32xf32> to vector<1x32xf32>
    %5 = vector.broadcast %4 : vector<1x32xf32> to vector<16x32xf32>
    %c0_2 = arith.constant 0 : index
    %c0_3 = arith.constant 0 : index
    %c0_4 = arith.constant 0 : index
    %6 = vector.load %arg2[%c0_2, %c0_3, %c0_4] : memref<1x16x768xbf16, #tpu.memory_space<vmem>>, vector<1x16x256xbf16>
    %7 = vector.shape_cast %6 : vector<1x16x256xbf16> to vector<16x256xbf16>
    %8 = arith.extf %7 : vector<16x256xbf16> to vector<16x256xf32>
    %cst = arith.constant 9.99999997E-7 : f32
    %9 = vector.broadcast %cst : f32 to vector<16x256xf32>
    %10 = arith.maximumf %8, %9 : vector<16x256xf32>
    %11 = arith.mulf %10, %10 : vector<16x256xf32>
    %12 = arith.mulf %11, %10 : vector<16x256xf32>
    %cst_5 = arith.constant dense<0.000000e+00> : vector<16xf32>
    %13 = vector.multi_reduction <add>, %12, %cst_5 [1] : vector<16x256xf32> to vector<16xf32>
    %14 = vector.shape_cast %13 : vector<16xf32> to vector<16x1xf32>
    %cst_6 = arith.constant 3.906250e-03 : f32
    %15 = vector.broadcast %cst_6 : f32 to vector<16x1xf32>
    %16 = arith.mulf %14, %15 : vector<16x1xf32>
    %17 = math.log %16 : vector<16x1xf32>
    %cst_7 = arith.constant 0.333333343 : f32
    %18 = vector.broadcast %cst_7 : f32 to vector<16x1xf32>
    %19 = arith.mulf %17, %18 : vector<16x1xf32>
    %20 = math.exp %19 : vector<16x1xf32>
    %c0_8 = arith.constant 0 : index
    %c0_9 = arith.constant 0 : index
    %21 = vector.load %arg3[%c0_8, %c0_9] : memref<8x32xf32, #tpu.memory_space<vmem>>, vector<1x32xf32>
    %22 = vector.broadcast %20 : vector<16x1xf32> to vector<16x32xf32>
    %23 = vector.broadcast %21 : vector<1x32xf32> to vector<16x32xf32>
    %24 = arith.mulf %22, %23 : vector<16x32xf32>
    %25 = arith.addf %5, %24 : vector<16x32xf32>
    %c0_10 = arith.constant 0 : index
    %c0_11 = arith.constant 0 : index
    %c256 = arith.constant 256 : index
    %26 = vector.load %arg2[%c0_10, %c0_11, %c256] : memref<1x16x768xbf16, #tpu.memory_space<vmem>>, vector<1x16x256xbf16>
    %27 = vector.shape_cast %26 : vector<1x16x256xbf16> to vector<16x256xbf16>
    %28 = arith.extf %27 : vector<16x256xbf16> to vector<16x256xf32>
    %cst_12 = arith.constant 9.99999997E-7 : f32
    %29 = vector.broadcast %cst_12 : f32 to vector<16x256xf32>
    %30 = arith.maximumf %28, %29 : vector<16x256xf32>
    %31 = arith.mulf %30, %30 : vector<16x256xf32>
    %32 = arith.mulf %31, %30 : vector<16x256xf32>
    %cst_13 = arith.constant dense<0.000000e+00> : vector<16xf32>
    %33 = vector.multi_reduction <add>, %32, %cst_13 [1] : vector<16x256xf32> to vector<16xf32>
    %34 = vector.shape_cast %33 : vector<16xf32> to vector<16x1xf32>
    %cst_14 = arith.constant 3.906250e-03 : f32
    %35 = vector.broadcast %cst_14 : f32 to vector<16x1xf32>
    %36 = arith.mulf %34, %35 : vector<16x1xf32>
    %37 = math.log %36 : vector<16x1xf32>
    %cst_15 = arith.constant 0.333333343 : f32
    %38 = vector.broadcast %cst_15 : f32 to vector<16x1xf32>
    %39 = arith.mulf %37, %38 : vector<16x1xf32>
    %40 = math.exp %39 : vector<16x1xf32>
    %c1 = arith.constant 1 : index
    %c0_16 = arith.constant 0 : index
    %41 = vector.load %arg3[%c1, %c0_16] : memref<8x32xf32, #tpu.memory_space<vmem>>, vector<1x32xf32>
    %42 = vector.broadcast %40 : vector<16x1xf32> to vector<16x32xf32>
    %43 = vector.broadcast %41 : vector<1x32xf32> to vector<16x32xf32>
    %44 = arith.mulf %42, %43 : vector<16x32xf32>
    %45 = arith.addf %25, %44 : vector<16x32xf32>
    %c0_17 = arith.constant 0 : index
    %c0_18 = arith.constant 0 : index
    %c512 = arith.constant 512 : index
    %46 = vector.load %arg2[%c0_17, %c0_18, %c512] : memref<1x16x768xbf16, #tpu.memory_space<vmem>>, vector<1x16x256xbf16>
    %47 = vector.shape_cast %46 : vector<1x16x256xbf16> to vector<16x256xbf16>
    %48 = arith.extf %47 : vector<16x256xbf16> to vector<16x256xf32>
    %cst_19 = arith.constant 9.99999997E-7 : f32
    %49 = vector.broadcast %cst_19 : f32 to vector<16x256xf32>
    %50 = arith.maximumf %48, %49 : vector<16x256xf32>
    %51 = arith.mulf %50, %50 : vector<16x256xf32>
    %52 = arith.mulf %51, %50 : vector<16x256xf32>
    %cst_20 = arith.constant dense<0.000000e+00> : vector<16xf32>
    %53 = vector.multi_reduction <add>, %52, %cst_20 [1] : vector<16x256xf32> to vector<16xf32>
    %54 = vector.shape_cast %53 : vector<16xf32> to vector<16x1xf32>
    %cst_21 = arith.constant 3.906250e-03 : f32
    %55 = vector.broadcast %cst_21 : f32 to vector<16x1xf32>
    %56 = arith.mulf %54, %55 : vector<16x1xf32>
    %57 = math.log %56 : vector<16x1xf32>
    %cst_22 = arith.constant 0.333333343 : f32
    %58 = vector.broadcast %cst_22 : f32 to vector<16x1xf32>
    %59 = arith.mulf %57, %58 : vector<16x1xf32>
    %60 = math.exp %59 : vector<16x1xf32>
    %c2 = arith.constant 2 : index
    %c0_23 = arith.constant 0 : index
    %61 = vector.load %arg3[%c2, %c0_23] : memref<8x32xf32, #tpu.memory_space<vmem>>, vector<1x32xf32>
    %62 = vector.broadcast %60 : vector<16x1xf32> to vector<16x32xf32>
    %63 = vector.broadcast %61 : vector<1x32xf32> to vector<16x32xf32>
    %64 = arith.mulf %62, %63 : vector<16x32xf32>
    %65 = arith.addf %45, %64 : vector<16x32xf32>
    %cst_24 = arith.constant dense<0.000000e+00> : vector<16xf32>
    %66 = vector.multi_reduction <add>, %65, %cst_24 [1] : vector<16x32xf32> to vector<16xf32>
    %67 = vector.shape_cast %66 : vector<16xf32> to vector<16x1xf32>
    %cst_25 = arith.constant 3.200000e+01 : f32
    %68 = vector.broadcast %cst_25 : f32 to vector<16x1xf32>
    %69 = arith.divf %67, %68 : vector<16x1xf32>
    %70 = vector.broadcast %69 : vector<16x1xf32> to vector<16x32xf32>
    %71 = arith.subf %65, %70 : vector<16x32xf32>
    %72 = arith.mulf %71, %71 : vector<16x32xf32>
    %cst_26 = arith.constant dense<0.000000e+00> : vector<16xf32>
    %73 = vector.multi_reduction <add>, %72, %cst_26 [1] : vector<16x32xf32> to vector<16xf32>
    %74 = vector.shape_cast %73 : vector<16xf32> to vector<16x1xf32>
    %cst_27 = arith.constant 3.200000e+01 : f32
    %75 = vector.broadcast %cst_27 : f32 to vector<16x1xf32>
    %76 = arith.divf %74, %75 : vector<16x1xf32>
    %cst_28 = arith.constant 9.99999974E-6 : f32
    %77 = vector.broadcast %cst_28 : f32 to vector<16x1xf32>
    %78 = arith.addf %76, %77 : vector<16x1xf32>
    %79 = math.rsqrt %78 : vector<16x1xf32>
    %80 = vector.broadcast %79 : vector<16x1xf32> to vector<16x32xf32>
    %81 = arith.mulf %71, %80 : vector<16x32xf32>
    %c0_29 = arith.constant 0 : index
    %c0_30 = arith.constant 0 : index
    %82 = vector.load %arg5[%c0_29, %c0_30] : memref<1x32xf32, #tpu.memory_space<vmem>>, vector<1x32xf32>
    %83 = vector.broadcast %82 : vector<1x32xf32> to vector<16x32xf32>
    %84 = arith.mulf %81, %83 : vector<16x32xf32>
    %c0_31 = arith.constant 0 : index
    %c0_32 = arith.constant 0 : index
    %85 = vector.load %arg6[%c0_31, %c0_32] : memref<1x32xf32, #tpu.memory_space<vmem>>, vector<1x32xf32>
    %86 = vector.broadcast %85 : vector<1x32xf32> to vector<16x32xf32>
    %87 = arith.addf %84, %86 : vector<16x32xf32>
    %cst_33 = arith.constant 0.000000e+00 : f32
    %88 = vector.broadcast %cst_33 : f32 to vector<16x32xf32>
    %89 = arith.maximumf %87, %88 : vector<16x32xf32>
    %c0_34 = arith.constant 0 : index
    %c0_35 = arith.constant 0 : index
    %90 = vector.load %arg7[%c0_34, %c0_35] : memref<32x32xf32, #tpu.memory_space<vmem>>, vector<32x32xf32>
    %cst_36 = arith.constant dense<0.000000e+00> : vector<16x32xf32>
    %91 = tpu.matmul %89, %90, %cst_36 {dimension_numbers = #tpu.dot_dimension_numbers<[1], [0], [0], [1], [0, 0, 1, 1], [], []>} : vector<16x32xf32>, vector<32x32xf32>, vector<16x32xf32> -> vector<16x32xf32>
    %c0_37 = arith.constant 0 : index
    %c0_38 = arith.constant 0 : index
    %92 = vector.load %arg8[%c0_37, %c0_38] : memref<1x32xf32, #tpu.memory_space<vmem>>, vector<1x32xf32>
    %93 = vector.broadcast %92 : vector<1x32xf32> to vector<16x32xf32>
    %94 = arith.addf %91, %93 : vector<16x32xf32>
    %95 = arith.mulf %94, %94 : vector<16x32xf32>
    %cst_39 = arith.constant dense<0.000000e+00> : vector<16xf32>
    %96 = vector.multi_reduction <add>, %95, %cst_39 [1] : vector<16x32xf32> to vector<16xf32>
    %97 = vector.shape_cast %96 : vector<16xf32> to vector<16x1xf32>
    %98 = math.sqrt %97 : vector<16x1xf32>
    %cst_40 = arith.constant 9.99999996E-13 : f32
    %99 = vector.broadcast %cst_40 : f32 to vector<16x1xf32>
    %100 = arith.maximumf %98, %99 : vector<16x1xf32>
    %101 = vector.broadcast %100 : vector<16x1xf32> to vector<16x32xf32>
    %102 = arith.divf %94, %101 : vector<16x32xf32>
    %c0_41 = arith.constant 0 : index
    %c0_42 = arith.constant 0 : index
    %103 = vector.load %arg10[%c0_41, %c0_42] : memref<16x32xf32, #tpu.memory_space<vmem>>, vector<16x32xf32>
    %104 = arith.addf %103, %102 : vector<16x32xf32>
    %c0_43 = arith.constant 0 : index
    %c0_44 = arith.constant 0 : index
    %105 = vector.load %arg10[%c0_43, %c0_44] : memref<16x32xf32, #tpu.memory_space<vmem>>, vector<16x32xf32>
    tpu.vector_store %arg10[%c0_43, %c0_44], %104 {strides = array<i32>} : memref<16x32xf32, #tpu.memory_space<vmem>>, vector<16x32xf32>,
    %c1_i32 = arith.constant 1 : i32
    %106 = arith.cmpi eq, %arg1, %c1_i32 : i32
    %107 = arith.extui %106 : i1 to i32
    %c0_i32_45 = arith.constant 0 : i32
    %108 = arith.cmpi ne, %107, %c0_i32_45 : i32
    scf.if %108 {
      %c0_46 = arith.constant 0 : index
      %c0_47 = arith.constant 0 : index
      %109 = vector.load %arg10[%c0_46, %c0_47] : memref<16x32xf32, #tpu.memory_space<vmem>>, vector<16x32xf32>
      %cst_48 = arith.constant 5.000000e-01 : f32
      %110 = vector.broadcast %cst_48 : f32 to vector<16x32xf32>
      %111 = arith.mulf %109, %110 : vector<16x32xf32>
      %112 = arith.mulf %111, %111 : vector<16x32xf32>
      %cst_49 = arith.constant dense<0.000000e+00> : vector<16xf32>
      %113 = vector.multi_reduction <add>, %112, %cst_49 [1] : vector<16x32xf32> to vector<16xf32>
      %114 = vector.shape_cast %113 : vector<16xf32> to vector<16x1xf32>
      %115 = math.sqrt %114 : vector<16x1xf32>
      %cst_50 = arith.constant 9.99999996E-13 : f32
      %116 = vector.broadcast %cst_50 : f32 to vector<16x1xf32>
      %117 = arith.maximumf %115, %116 : vector<16x1xf32>
      %118 = vector.broadcast %117 : vector<16x1xf32> to vector<16x32xf32>
      %119 = arith.divf %111, %118 : vector<16x32xf32>
      %c0_51 = arith.constant 0 : index
      %c0_52 = arith.constant 0 : index
      %120 = vector.load %arg9[%c0_51, %c0_52] : memref<16x32xf32, #tpu.memory_space<vmem>>, vector<16x32xf32>
      tpu.vector_store %arg9[%c0_51, %c0_52], %119 {strides = array<i32>} : memref<16x32xf32, #tpu.memory_space<vmem>>, vector<16x32xf32>,
    } else {
    }
    return
  }
  func.func @transform_0(%arg0: i32, %arg1: i32) -> (i32, i32, i32) {
    %c0_i32 = arith.constant 0 : i32
    %c0_i32_0 = arith.constant 0 : i32
    return %arg1, %arg0, %c0_i32 : i32, i32, i32
  }
  func.func @transform_1(%arg0: i32, %arg1: i32) -> (i32, i32) {
    %c0_i32 = arith.constant 0 : i32
    %c0_i32_0 = arith.constant 0 : i32
    %c0_i32_1 = arith.constant 0 : i32
    return %c0_i32, %c0_i32_0 : i32, i32
  }
  func.func @transform_2(%arg0: i32, %arg1: i32) -> (i32, i32) {
    %c0_i32 = arith.constant 0 : i32
    %c0_i32_0 = arith.constant 0 : i32
    %c0_i32_1 = arith.constant 0 : i32
    return %c0_i32, %c0_i32_0 : i32, i32
  }
  func.func @transform_3(%arg0: i32, %arg1: i32) -> (i32, i32) {
    %c0_i32 = arith.constant 0 : i32
    %c0_i32_0 = arith.constant 0 : i32
    %c0_i32_1 = arith.constant 0 : i32
    return %c0_i32, %c0_i32_0 : i32, i32
  }
  func.func @transform_4(%arg0: i32, %arg1: i32) -> (i32, i32) {
    %c0_i32 = arith.constant 0 : i32
    %c0_i32_0 = arith.constant 0 : i32
    %c0_i32_1 = arith.constant 0 : i32
    return %c0_i32, %c0_i32_0 : i32, i32
  }
  func.func @transform_5(%arg0: i32, %arg1: i32) -> (i32, i32) {
    %c0_i32 = arith.constant 0 : i32
    %c0_i32_0 = arith.constant 0 : i32
    %c0_i32_1 = arith.constant 0 : i32
    return %c0_i32, %c0_i32_0 : i32, i32
  }
  func.func @transform_6(%arg0: i32, %arg1: i32) -> (i32, i32) {
    %c0_i32 = arith.constant 0 : i32
    %c0_i32_0 = arith.constant 0 : i32
    %c0_i32_1 = arith.constant 0 : i32
    return %c0_i32, %c0_i32_0 : i32, i32
  }
  func.func @transform_7(%arg0: i32, %arg1: i32) -> (i32, i32) {
    %c0_i32 = arith.constant 0 : i32
    %c0_i32_0 = arith.constant 0 : i32
    return %arg0, %c0_i32 : i32, i32
  }
}

</mosaic_0001>

<llo_original>
// kernel: forward_db.1
$region0: #{forward_db.1}
  #allocation0 [shape = 'u32[]', space=smem, size = 0x4, offset = 0x4, fixed_abs, tag = 'smem constant byte address 0x4 - core index']
  #allocation1 [shape = 'u32[144,128]{1,0:T(1,128)}', space=vmem, size = 0x12000, scoped, tag = 'internal scratch']
  #allocation2 [shape = 'f32[16,32]{1,0:T(8,128)}', space=vmem, size = 0x2000, scoped, tag = 'scratch operand']
  %s0 = inlined_call_operand.vmem [shape: bf16[2,32,768], index: 0, kind: input, shape index: {}]
  %s1 = inlined_call_operand.vmem [shape: f32[8,32], index: 1, kind: input, shape index: {}]
  %s2 = inlined_call_operand.vmem [shape: f32[1,32], index: 2, kind: input, shape index: {}]
  %s3 = inlined_call_operand.vmem [shape: f32[1,32], index: 3, kind: input, shape index: {}]
  %s4 = inlined_call_operand.vmem [shape: f32[1,32], index: 4, kind: input, shape index: {}]
  %s5 = inlined_call_operand.vmem [shape: f32[32,32], index: 5, kind: input, shape index: {}]
  %s6 = inlined_call_operand.vmem [shape: f32[1,32], index: 6, kind: input, shape index: {}]
  %s7 = inlined_call_operand.vmem [shape: f32[32,32], index: 7, kind: output, shape index: {}]
  %s8 = sld [smem:[#allocation0]]
  $region69: #{forward_db.1} parent=0
    _
  %s10 = ssub.s32 1, %s8
  %s11 = scalar_select 0, %s10, %s8
  loop: start=0, step=1, limit=6
  $region2: #{forward_db.1} parent=0 // loop_pre_header
    _
  $region3: #{forward_db.1} parent=0 // loop_header
    %s13 = sphi 0, %s17
    %p14 = scmp.ge.s32.totalorder %s13, 6
    %s20 = sphi 0, %s32
    %s21 = sphi 0, %s28
    %s22 = sphi 0, %s20
    %s23 = sphi 0, %s21
    %s24 = sphi 0, %s22
    %s25 = sphi 0, %s23
    %s37 = sphi 0, %s39
    %s40 = sphi 0, %s37
    %s41 = sphi 0, %s40
    %s57 = sphi 0, %s41
    %s61 = sphi 0, %s61
    %s63 = sphi 0, %s61
    %s64 = sphi 0, %s63
    %s78 = sphi 0, %s64
    %s82 = sphi 0, %s82
    %s84 = sphi 0, %s82
    %s85 = sphi 0, %s84
    %s99 = sphi 0, %s85
    %s103 = sphi 0, %s103
    %s105 = sphi 0, %s103
    %s106 = sphi 0, %s105
    %s120 = sphi 0, %s106
    %s124 = sphi 0, %s124
    %s126 = sphi 0, %s124
    %s127 = sphi 0, %s126
    %s141 = sphi 0, %s127
    %s145 = sphi 0, %s145
    %s147 = sphi 0, %s145
    %s148 = sphi 0, %s147
    %s162 = sphi 0, %s148
    %s166 = sphi 0, %s166
    %s168 = sphi 0, %s166
    %s169 = sphi 0, %s168
    %s183 = sphi 0, %s169
    %s189 = sphi 0, %s191
    %s192 = sphi 0, %s189
    %s193 = sphi 0, %s192
    %s209 = sphi 0, %s193
  $region4: #{forward_db.1} parent=0 // loop_header_branch
    %16 = sbr.rel (%p14) target = $region8
  $region5: #{forward_db.1} parent=0 // loop_body
    %s18 = ssub.s32 %s13, 1
    %s19 = ssub.s32 %s13, 2
    %s26 = sadd.s32 1, %s21
    %p27 = scmp.ge.s32.totalorder %s26, 2
    %s28 = scalar_select %p27, 0, %s26
    %s29 = sadd.s32 1, %s20
    %s30 = scalar_select %p27, %s29, %s20
    %p31 = scmp.ge.s32.totalorder %s30, 2
    %s32 = scalar_select %p31, 0, %s30
    %s33 = ssub.s32 %s21, %s28
    %s34 = ssub.s32 %s20, %s32
    %s35 = sor.u32 %s33, %s34
    %p36 = scmp.eq.s32.totalorder %s35, 0
    %s38 = sadd.s32 %s37, 1
    %s39 = scalar_select %p36, %s37, %s38
    %p42 = pneg %p36
    %p43 = scmp.eq.s32.totalorder %s13, 3
    %p44 = por %p42, %p43
    %p45 = scmp.ne.s32.totalorder %s37, %s40
    %p46 = scmp.eq.s32.totalorder %s13, 0
    %p47 = por %p45, %p46
    %p48 = scmp.ne.s32.totalorder %s37, %s40
    %p49 = scmp.eq.s32.totalorder %s18, 3
    %p50 = por %p48, %p49
    %p51 = scmp.ne.s32.totalorder %s40, %s41
    %p52 = scmp.eq.s32.totalorder %s18, 0
    %p53 = por %p51, %p52
    %p54 = scmp.ne.s32.totalorder %s40, %s41
    %p55 = scmp.eq.s32.totalorder %s19, 3
    %p56 = por %p54, %p55
    %p58 = scmp.ne.s32.totalorder %s41, %s57
    %p59 = scmp.eq.s32.totalorder %s19, 0
    %p60 = por %p58, %p59
    %s62 = sadd.s32 %s61, 1
    %p65 = scmp.eq.s32.totalorder %s13, 3
    %p66 = scmp.ne.s32.totalorder %s61, %s63
    %p67 = scmp.eq.s32.totalorder %s13, 0
    %p68 = por %p66, %p67
    %p69 = scmp.ne.s32.totalorder %s61, %s63
    %p70 = scmp.eq.s32.totalorder %s18, 3
    %p71 = por %p69, %p70
    %p72 = scmp.ne.s32.totalorder %s63, %s64
    %p73 = scmp.eq.s32.totalorder %s18, 0
    %p74 = por %p72, %p73
    %p75 = scmp.ne.s32.totalorder %s63, %s64
    %p76 = scmp.eq.s32.totalorder %s19, 3
    %p77 = por %p75, %p76
    %p79 = scmp.ne.s32.totalorder %s64, %s78
    %p80 = scmp.eq.s32.totalorder %s19, 0
    %p81 = por %p79, %p80
    %s83 = sadd.s32 %s82, 1
    %p86 = scmp.eq.s32.totalorder %s13, 3
    %p87 = scmp.ne.s32.totalorder %s82, %s84
    %p88 = scmp.eq.s32.totalorder %s13, 0
    %p89 = por %p87, %p88
    %p90 = scmp.ne.s32.totalorder %s82, %s84
    %p91 = scmp.eq.s32.totalorder %s18, 3
    %p92 = por %p90, %p91
    %p93 = scmp.ne.s32.totalorder %s84, %s85
    %p94 = scmp.eq.s32.totalorder %s18, 0
    %p95 = por %p93, %p94
    %p96 = scmp.ne.s32.totalorder %s84, %s85
    %p97 = scmp.eq.s32.totalorder %s19, 3
    %p98 = por %p96, %p97
    %p100 = scmp.ne.s32.totalorder %s85, %s99
    %p101 = scmp.eq.s32.totalorder %s19, 0
    %p102 = por %p100, %p101
    %s104 = sadd.s32 %s103, 1
    %p107 = scmp.eq.s32.totalorder %s13, 3
    %p108 = scmp.ne.s32.totalorder %s103, %s105
    %p109 = scmp.eq.s32.totalorder %s13, 0
    %p110 = por %p108, %p109
    %p111 = scmp.ne.s32.totalorder %s103, %s105
    %p112 = scmp.eq.s32.totalorder %s18, 3
    %p113 = por %p111, %p112
    %p114 = scmp.ne.s32.totalorder %s105, %s106
    %p115 = scmp.eq.s32.totalorder %s18, 0
    %p116 = por %p114, %p115
    %p117 = scmp.ne.s32.totalorder %s105, %s106
    %p118 = scmp.eq.s32.totalorder %s19, 3
    %p119 = por %p117, %p118
    %p121 = scmp.ne.s32.totalorder %s106, %s120
    %p122 = scmp.eq.s32.totalorder %s19, 0
    %p123 = por %p121, %p122
    %s125 = sadd.s32 %s124, 1
    %p128 = scmp.eq.s32.totalorder %s13, 3
    %p129 = scmp.ne.s32.totalorder %s124, %s126
    %p130 = scmp.eq.s32.totalorder %s13, 0
    %p131 = por %p129, %p130
    %p132 = scmp.ne.s32.totalorder %s124, %s126
    %p133 = scmp.eq.s32.totalorder %s18, 3
    %p134 = por %p132, %p133
    %p135 = scmp.ne.s32.totalorder %s126, %s127
    %p136 = scmp.eq.s32.totalorder %s18, 0
    %p137 = por %p135, %p136
    %p138 = scmp.ne.s32.totalorder %s126, %s127
    %p139 = scmp.eq.s32.totalorder %s19, 3
    %p140 = por %p138, %p139
    %p142 = scmp.ne.s32.totalorder %s127, %s141
    %p143 = scmp.eq.s32.totalorder %s19, 0
    %p144 = por %p142, %p143
    %s146 = sadd.s32 %s145, 1
    %p149 = scmp.eq.s32.totalorder %s13, 3
    %p150 = scmp.ne.s32.totalorder %s145, %s147
    %p151 = scmp.eq.s32.totalorder %s13, 0
    %p152 = por %p150, %p151
    %p153 = scmp.ne.s32.totalorder %s145, %s147
    %p154 = scmp.eq.s32.totalorder %s18, 3
    %p155 = por %p153, %p154
    %p156 = scmp.ne.s32.totalorder %s147, %s148
    %p157 = scmp.eq.s32.totalorder %s18, 0
    %p158 = por %p156, %p157
    %p159 = scmp.ne.s32.totalorder %s147, %s148
    %p160 = scmp.eq.s32.totalorder %s19, 3
    %p161 = por %p159, %p160
    %p163 = scmp.ne.s32.totalorder %s148, %s162
    %p164 = scmp.eq.s32.totalorder %s19, 0
    %p165 = por %p163, %p164
    %s167 = sadd.s32 %s166, 1
    %p170 = scmp.eq.s32.totalorder %s13, 3
    %p171 = scmp.ne.s32.totalorder %s166, %s168
    %p172 = scmp.eq.s32.totalorder %s13, 0
    %p173 = por %p171, %p172
    %p174 = scmp.ne.s32.totalorder %s166, %s168
    %p175 = scmp.eq.s32.totalorder %s18, 3
    %p176 = por %p174, %p175
    %p177 = scmp.ne.s32.totalorder %s168, %s169
    %p178 = scmp.eq.s32.totalorder %s18, 0
    %p179 = por %p177, %p178
    %p180 = scmp.ne.s32.totalorder %s168, %s169
    %p181 = scmp.eq.s32.totalorder %s19, 3
    %p182 = por %p180, %p181
    %p184 = scmp.ne.s32.totalorder %s169, %s183
    %p185 = scmp.eq.s32.totalorder %s19, 0
    %p186 = por %p184, %p185
    %s187 = ssub.s32 %s20, %s32
    %p188 = scmp.eq.s32.totalorder %s187, 0
    %s190 = sadd.s32 %s189, 1
    %s191 = scalar_select %p188, %s189, %s190
    %p194 = pneg %p188
    %p195 = scmp.eq.s32.totalorder %s13, 3
    %p196 = por %p194, %p195
    %p197 = scmp.ne.s32.totalorder %s189, %s192
    %p198 = scmp.eq.s32.totalorder %s13, 0
    %p199 = por %p197, %p198
    %p200 = scmp.ne.s32.totalorder %s189, %s192
    %p201 = scmp.eq.s32.totalorder %s18, 3
    %p202 = por %p200, %p201
    %p203 = scmp.ne.s32.totalorder %s192, %s193
    %p204 = scmp.eq.s32.totalorder %s18, 0
    %p205 = por %p203, %p204
    %p206 = scmp.ne.s32.totalorder %s192, %s193
    %p207 = scmp.eq.s32.totalorder %s19, 3
    %p208 = por %p206, %p207
    %p210 = scmp.ne.s32.totalorder %s193, %s209
    %p211 = scmp.eq.s32.totalorder %s19, 0
    %p212 = por %p210, %p211
    %p213 = scmp.le.s32.totalorder 1, %s13
    %p214 = scmp.lt.s32.totalorder %s13, 5
    %p215 = pnand %p213, %p214
    %p216 = pneg %p215
    // Predicated region
    $region9: #{forward_db.1} parent=5 // pred_check
      _
    $region10: #{forward_db.1} parent=5 // pred_check_branch
      %218 = sbr.rel (%p215) target = $region12
    $region11: #{forward_db.1} parent=5 // pred_region
      %s219 = ssub.s32 %s13, 1
      // Predicated region
      $region13: #{forward_db.1} parent=11 // pred_check
        %p220 = pneg %p74
      $region14: #{forward_db.1} parent=11 // pred_check_branch
        %222 = sbr.rel (%p220) target = $region16
      $region15: #{forward_db.1} parent=11 // pred_region
        _
      $region16: #{forward_db.1} parent=11 // pred_fallthru
        _
      // Predicated region
      $region17: #{forward_db.1} parent=11 // pred_check
        %p223 = pneg %p95
      $region18: #{forward_db.1} parent=11 // pred_check_branch
        %225 = sbr.rel (%p223) target = $region20
      $region19: #{forward_db.1} parent=11 // pred_region
        _
      $region20: #{forward_db.1} parent=11 // pred_fallthru
        _
      // Predicated region
      $region21: #{forward_db.1} parent=11 // pred_check
        %p226 = pneg %p116
      $region22: #{forward_db.1} parent=11 // pred_check_branch
        %228 = sbr.rel (%p226) target = $region24
      $region23: #{forward_db.1} parent=11 // pred_region
        _
      $region24: #{forward_db.1} parent=11 // pred_fallthru
        _
      // Predicated region
      $region25: #{forward_db.1} parent=11 // pred_check
        %p229 = pneg %p137
      $region26: #{forward_db.1} parent=11 // pred_check_branch
        %231 = sbr.rel (%p229) target = $region28
      $region27: #{forward_db.1} parent=11 // pred_region
        _
      $region28: #{forward_db.1} parent=11 // pred_fallthru
        _
      // Predicated region
      $region29: #{forward_db.1} parent=11 // pred_check
        %p232 = pneg %p158
      $region30: #{forward_db.1} parent=11 // pred_check_branch
        %234 = sbr.rel (%p232) target = $region32
      $region31: #{forward_db.1} parent=11 // pred_region
        _
      $region32: #{forward_db.1} parent=11 // pred_fallthru
        _
      // Predicated region
      $region33: #{forward_db.1} parent=11 // pred_check
        %p235 = pneg %p179
      $region34: #{forward_db.1} parent=11 // pred_check_branch
        %237 = sbr.rel (%p235) target = $region36
      $region35: #{forward_db.1} parent=11 // pred_region
        _
      $region36: #{forward_db.1} parent=11 // pred_fallthru
        _
    $region12: #{forward_db.1} parent=5 // pred_fallthru
      _
    %p238 = scmp.lt.s32.totalorder %s13, 4
    // Predicated region
    $region37: #{forward_db.1} parent=5 // pred_check
      %p239 = pneg %p238
    $region38: #{forward_db.1} parent=5 // pred_check_branch
      %241 = sbr.rel (%p239) target = $region40
    $region39: #{forward_db.1} parent=5 // pred_region
      // Predicated region
      $region41: #{forward_db.1} parent=39 // pred_check
        %p242 = pneg %p47
      $region42: #{forward_db.1} parent=39 // pred_check_branch
        %244 = sbr.rel (%p242) target = $region44
      $region43: #{forward_db.1} parent=39 // pred_region
        %s245 = smul.u32 2, %s20
        %p246 = scmp.lt.s32.totalorder %s21, 1
        %s247 = scalar_select %p246, %s21, 1
        %p248 = scmp.lt.s32.totalorder %s245, 3
        %s249 = scalar_select %p248, %s245, 3
        %s250 = smul.addr %s249, 6
        %s251 = smul.addr %s247, 24
        %s252 = sadd.s32 %s250, %s251
        %s253 = smul.addr %s252, 4
        %s254 = scalar_lea.vmem %s0, %s253
        %s255 = smul.u32 2, %s20
      $region44: #{forward_db.1} parent=39 // pred_fallthru
        _
    $region40: #{forward_db.1} parent=5 // pred_fallthru
      _
    %p256 = scmp.le.s32.totalorder 1, %s13
    %p257 = scmp.lt.s32.totalorder %s13, 5
    %p258 = pnand %p256, %p257
    %p259 = pneg %p258
    // Predicated region
    $region45: #{forward_db.1} parent=5 // pred_check
      _
    $region46: #{forward_db.1} parent=5 // pred_check_branch
      %261 = sbr.rel (%p258) target = $region48
    $region47: #{forward_db.1} parent=5 // pred_region
      %s262 = ssub.s32 %s13, 1
      %s263 = smul.u32 2, %s22
      %p264 = scmp.lt.s32.totalorder %s23, 1
      %s265 = scalar_select %p264, %s23, 1
      %p266 = scmp.lt.s32.totalorder %s263, 3
      %s267 = scalar_select %p266, %s263, 3
      %s268 = smul.addr %s267, 6
      %s269 = smul.addr %s265, 24
      %s270 = sadd.s32 %s268, %s269
      %s271 = smul.addr %s270, 4
      %s272 = scalar_lea.vmem %s0, %s271
      %p273 = pneg %p53
      %p274 = pneg %p50
      %p275 = pneg %p74
      %p276 = pneg %p71
      %p277 = pneg %p95
      %p278 = pneg %p92
      %p279 = pneg %p116
      %p280 = pneg %p113
      %p281 = pneg %p137
      %p282 = pneg %p134
      %p283 = pneg %p158
      %p284 = pneg %p155
      %p285 = pneg %p179
      %p286 = pneg %p176
      %p287 = pneg %p205
      %p288 = pneg %p202
      %s289 = smul.u32 2, %s22
      %p290 = scmp.lt.s32.totalorder %s289, 3
      %s291 = scalar_select %p290, %s289, 3
      %s292 = smul.addr %s291, 8
      %s293 = scalar_lea.vmem %s7, %s292
      %s294 = smul.u32 2, %s22
      %p295 = scmp.lt.s32.totalorder %s23, 1
      %s296 = scalar_select %p295, %s23, 1
      %p297 = scmp.lt.s32.totalorder %s294, 3
      %s298 = scalar_select %p297, %s294, 3
      %s299 = smul.addr %s298, 6
      %s300 = smul.addr %s296, 24
      %s301 = sadd.s32 %s299, %s300
      %s302 = smul.addr %s301, 4
      %s303 = scalar_lea.vmem %s0, %s302
      %s304 = smul.u32 2, %s22
      %s305 = smul.u32 2, %s22
      %p306 = scmp.lt.s32.totalorder %s305, 3
      %s307 = scalar_select %p306, %s305, 3
      %s308 = smul.addr %s307, 8
      %s309 = scalar_lea.vmem %s7, %s308
      %s310 = smul.u32 2, %s22
      %p311 = scmp.eq.s32.totalorder %s23, 0
      // Predicated region
      $region49: #{forward_db.1} parent=47 // pred_check
        %p312 = pneg %p311
      $region50: #{forward_db.1} parent=47 // pred_check_branch
        %314 = sbr.rel (%p312) target = $region52
      $region51: #{forward_db.1} parent=47 // pred_region
        %vm315 = vcmask 261120
        %316 = vst.msk [vmem:[#allocation2] sm:$0xff] %vm315, 0.0
        %317 = vst.msk [vmem:[#allocation2 + $0x8] sm:$0xff] %vm315, 0.0
      $region52: #{forward_db.1} parent=47 // pred_fallthru
        _
      %v318 = vld [vmem:[%s2] sm:$0x1]
      %v320 = vlaneseq
      %v321 = vshrl.u32 %v320, 7
      %v322 = vsub.s32 0, %v321
      %v323 = vrot.slane %v318, %v322
      %v325 = vld [vmem:[%s303] sm:$0xff]
      %v326 = vld [vmem:[%s303 + $0x18] sm:$0xff]
      %v327 = vunpack.c.l.bf16 %v325
      %v328 = vunpack.c.h.bf16 %v325
      %v329 = vunpack.c.l.bf16 %v326
      %v330 = vunpack.c.h.bf16 %v326
      %v331 = vmax.f32 %v327, 1e-06
      %v332 = vmax.f32 %v328, 1e-06
      %v333 = vmax.f32 %v329, 1e-06
      %v334 = vmax.f32 %v330, 1e-06
      %v335 = vmul.f32 %v331, %v331
      %v336 = vmul.f32 %v332, %v332
      %v337 = vmul.f32 %v333, %v333
      %v338 = vmul.f32 %v334, %v334
      %v339 = vmul.f32 %v335, %v331
      %v340 = vmul.f32 %v336, %v332
      %v341 = vmul.f32 %v337, %v333
      %v342 = vmul.f32 %v338, %v334
      %v343 = vadd.f32 %v339, %v340
      %344 = vadd.xlane.f32.xlu0 %v343
      %v345 = vpop.xlane.xlu0 %344
      %v346 = vadd.f32 %v341, %v342
      %347 = vadd.xlane.f32.xlu0 %v346
      %v348 = vpop.xlane.xlu0 %347
      %v349 = vmul.f32 %v345, 0.00390625
      %v350 = vmul.f32 %v348, 0.00390625
      %v351 = vlog2.pop %v349
      %v352 = vmul.f32 %v351, 0.6931472
      %v353 = vlog2.pop %v350
      %v354 = vmul.f32 %v353, 0.6931472
      %v355 = vmul.f32 %v352, 0.33333334
      %v356 = vmul.f32 %v354, 0.33333334
      %v357 = vmul.f32 %v355, 1.442695
      %v358 = vpow.pop %v357
      %v359 = vmul.f32 %v356, 1.442695
      %v360 = vpow.pop %v359
      %v361 = vld [vmem:[%s1] sm:$0x1]
      %v362 = vlaneseq
      %v363 = vshrl.u32 %v362, 7
      %v364 = vsub.s32 0, %v363
      %v365 = vrot.slane %v361, %v364
      %v366 = vmul.f32 %v358, %v365
      %v367 = vmul.f32 %v360, %v365
      %v368 = vadd.f32 %v323, %v366
      %v369 = vadd.f32 %v323, %v367
      %v370 = vld [vmem:[%s303 + $0x8] sm:$0xff]
      %v371 = vld [vmem:[%s303 + $0x20] sm:$0xff]
      %v372 = vunpack.c.l.bf16 %v370
      %v373 = vunpack.c.h.bf16 %v370
      %v374 = vunpack.c.l.bf16 %v371
      %v375 = vunpack.c.h.bf16 %v371
      %v376 = vmax.f32 %v372, 1e-06
      %v377 = vmax.f32 %v373, 1e-06
      %v378 = vmax.f32 %v374, 1e-06
      %v379 = vmax.f32 %v375, 1e-06
      %v380 = vmul.f32 %v376, %v376
      %v381 = vmul.f32 %v377, %v377
      %v382 = vmul.f32 %v378, %v378
      %v383 = vmul.f32 %v379, %v379
      %v384 = vmul.f32 %v380, %v376
      %v385 = vmul.f32 %v381, %v377
      %v386 = vmul.f32 %v382, %v378
      %v387 = vmul.f32 %v383, %v379
      %v388 = vadd.f32 %v384, %v385
      %389 = vadd.xlane.f32.xlu0 %v388
      %v390 = vpop.xlane.xlu0 %389
      %v391 = vadd.f32 %v386, %v387
      %392 = vadd.xlane.f32.xlu0 %v391
      %v393 = vpop.xlane.xlu0 %392
      %v394 = vmul.f32 %v390, 0.00390625
      %v395 = vmul.f32 %v393, 0.00390625
      %v396 = vlog2.pop %v394
      %v397 = vmul.f32 %v396, 0.6931472
      %v398 = vlog2.pop %v395
      %v399 = vmul.f32 %v398, 0.6931472
      %v400 = vmul.f32 %v397, 0.33333334
      %v401 = vmul.f32 %v399, 0.33333334
      %v402 = vmul.f32 %v400, 1.442695
      %v403 = vpow.pop %v402
      %v404 = vmul.f32 %v401, 1.442695
      %v405 = vpow.pop %v404
      %v406 = vld [vmem:[%s1 + $0x1] sm:$0x1]
      %v407 = vlaneseq
      %v408 = vshrl.u32 %v407, 7
      %v409 = vsub.s32 0, %v408
      %v410 = vrot.slane %v406, %v409
      %v411 = vmul.f32 %v403, %v410
      %v412 = vmul.f32 %v405, %v410
      %v413 = vadd.f32 %v368, %v411
      %v414 = vadd.f32 %v369, %v412
      %v415 = vld [vmem:[%s303 + $0x10] sm:$0xff]
      %v416 = vld [vmem:[%s303 + $0x28] sm:$0xff]
      %v417 = vunpack.c.l.bf16 %v415
      %v418 = vunpack.c.h.bf16 %v415
      %v419 = vunpack.c.l.bf16 %v416
      %v420 = vunpack.c.h.bf16 %v416
      %v421 = vmax.f32 %v417, 1e-06
      %v422 = vmax.f32 %v418, 1e-06
      %v423 = vmax.f32 %v419, 1e-06
      %v424 = vmax.f32 %v420, 1e-06
      %v425 = vmul.f32 %v421, %v421
      %v426 = vmul.f32 %v422, %v422
      %v427 = vmul.f32 %v423, %v423
      %v428 = vmul.f32 %v424, %v424
      %v429 = vmul.f32 %v425, %v421
      %v430 = vmul.f32 %v426, %v422
      %v431 = vmul.f32 %v427, %v423
      %v432 = vmul.f32 %v428, %v424
      %v433 = vadd.f32 %v429, %v430
      %434 = vadd.xlane.f32.xlu0 %v433
      %v435 = vpop.xlane.xlu0 %434
      %v436 = vadd.f32 %v431, %v432
      %437 = vadd.xlane.f32.xlu0 %v436
      %v438 = vpop.xlane.xlu0 %437
      %v439 = vmul.f32 %v435, 0.00390625
      %v440 = vmul.f32 %v438, 0.00390625
      %v441 = vlog2.pop %v439
      %v442 = vmul.f32 %v441, 0.6931472
      %v443 = vlog2.pop %v440
      %v444 = vmul.f32 %v443, 0.6931472
      %v445 = vmul.f32 %v442, 0.33333334
      %v446 = vmul.f32 %v444, 0.33333334
      %v447 = vmul.f32 %v445, 1.442695
      %v448 = vpow.pop %v447
      %v449 = vmul.f32 %v446, 1.442695
      %v450 = vpow.pop %v449
      %v451 = vld [vmem:[%s1 + $0x2] sm:$0x1]
      %v452 = vlaneseq
      %v453 = vshrl.u32 %v452, 7
      %v454 = vsub.s32 0, %v453
      %v455 = vrot.slane %v451, %v454
      %v456 = vmul.f32 %v448, %v455
      %v457 = vmul.f32 %v450, %v455
      %v458 = vadd.f32 %v413, %v456
      %v459 = vadd.f32 %v414, %v457
      %vm460 = vcmask 261120
      %v461 = vsel %vm460, %v458, 0.0
      %462 = vadd.xlane.f32.xlu0 %v461
      %v463 = vpop.xlane.xlu0 %462
      %v464 = vsel %vm460, %v459, 0.0
      %465 = vadd.xlane.f32.xlu0 %v464
      %v466 = vpop.xlane.xlu0 %465
      %v467 = vrcp.pop 32.0
      %v468 = vmul.f32 %v463, %v467
      %v469 = vmul.f32 %v466, %v467
      %v470 = vsub.f32 %v458, %v468
      %v471 = vsub.f32 %v459, %v469
      %v472 = vmul.f32 %v470, %v470
      %v473 = vmul.f32 %v471, %v471
      %v474 = vsel %vm460, %v472, 0.0
      %475 = vadd.xlane.f32.xlu0 %v474
      %v476 = vpop.xlane.xlu0 %475
      %v477 = vsel %vm460, %v473, 0.0
      %478 = vadd.xlane.f32.xlu0 %v477
      %v479 = vpop.xlane.xlu0 %478
      %v480 = vmul.f32 %v476, %v467
      %v481 = vmul.f32 %v479, %v467
      %v482 = vadd.f32 %v480, 1e-05
      %v483 = vadd.f32 %v481, 1e-05
      %v484 = vrsqrt.pop %v482
      %v485 = vrsqrt.pop %v483
      %v486 = vmul.f32 %v470, %v484
      %v487 = vmul.f32 %v471, %v485
      %v488 = vld [vmem:[%s3] sm:$0x1]
      %v490 = vlaneseq
      %v491 = vshrl.u32 %v490, 7
      %v492 = vsub.s32 0, %v491
      %v493 = vrot.slane %v488, %v492
      %v495 = vmul.f32 %v486, %v493
      %v496 = vmul.f32 %v487, %v493
      %v497 = vld [vmem:[%s4] sm:$0x1]
      %v499 = vlaneseq
      %v500 = vshrl.u32 %v499, 7
      %v501 = vsub.s32 0, %v500
      %v502 = vrot.slane %v497, %v501
      %v504 = vadd.f32 %v495, %v502
      %v505 = vadd.f32 %v496, %v502
      %v506 = vmax.f32 %v504, 0.0
      %v507 = vmax.f32 %v505, 0.0
      %v508 = vld [vmem:[%s5] sm:$0xff]
      %v509 = vld [vmem:[%s5 + $0x8] sm:$0xff]
      %v510 = vld [vmem:[%s5 + $0x10] sm:$0xff]
      %v511 = vld [vmem:[%s5 + $0x18] sm:$0xff]
      %v512 = vld [vmem:[%s6] sm:$0x1]
      %v514 = vlaneseq
      %v515 = vshrl.u32 %v514, 7
      %v516 = vsub.s32 0, %v515
      %v517 = vrot.slane %v512, %v516
      %v520 = vsel %vm460, %v506, 0
      %v523 = vsel %vm460, %v507, 0
      %525 = vmatprep.subr.mxu0 0.0
      %526 = vmatpush1.msra.mxu0 %v508
      %527 = vmatprep.subr.mxu0 0.0
      %528 = vmatpush1.msra.mxu0 %v509
      %529 = vmatprep.subr.mxu0 0.0
      %530 = vmatpush1.msra.mxu0 %v510
      %531 = vmatprep.subr.mxu0 0.0
      %532 = vmatpush1.msra.mxu0 %v511
      %533 = vmatprep.subr.mxu0 0.0
      %534 = vmatpush1.msra.mxu0 0.0
      %535 = vmatprep.subr.mxu0 0.0
      %536 = vmatpush1.msra.mxu0 0.0
      %537 = vmatprep.subr.mxu0 0.0
      %538 = vmatpush1.msra.mxu0 0.0
      %539 = vmatprep.subr.mxu0 0.0
      %540 = vmatpush1.msra.mxu0 0.0
      %541 = vmatprep.subr.mxu0 0.0
      %542 = vmatpush1.msra.mxu0 0.0
      %543 = vmatprep.subr.mxu0 0.0
      %544 = vmatpush1.msra.mxu0 0.0
      %545 = vmatprep.subr.mxu0 0.0
      %546 = vmatpush1.msra.mxu0 0.0
      %547 = vmatprep.subr.mxu0 0.0
      %548 = vmatpush1.msra.mxu0 0.0
      %549 = vmatprep.subr.mxu0 0.0
      %550 = vmatpush1.msra.mxu0 0.0
      %551 = vmatprep.subr.mxu0 0.0
      %552 = vmatpush1.msra.mxu0 0.0
      %553 = vmatprep.subr.mxu0 0.0
      %554 = vmatpush1.msra.mxu0 0.0
      %555 = vmatprep.subr.mxu0 0.0
      %556 = vmatpush1.msra.mxu0 0.0
      %557 = vmatprep.subr.mxu0 0.0
      %558 = vmatpush1.msra.mxu0 0.0
      %559 = vmatprep.subr.mxu0 0.0
      %560 = vmatpush1.msra.mxu0 0.0
      %561 = vmatprep.subr.mxu0 0.0
      %562 = vmatpush1.msra.mxu0 0.0
      %563 = vmatprep.subr.mxu0 0.0
      %564 = vmatpush1.msra.mxu0 0.0
      %565 = vmatprep.subr.mxu0 0.0
      %566 = vmatpush1.msra.mxu0 0.0
      %567 = vmatprep.subr.mxu0 0.0
      %568 = vmatpush1.msra.mxu0 0.0
      %569 = vmatprep.subr.mxu0 0.0
      %570 = vmatpush1.msra.mxu0 0.0
      %571 = vmatprep.subr.mxu0 0.0
      %572 = vmatpush1.msra.mxu0 0.0
      %573 = vmatprep.subr.mxu0 0.0
      %574 = vmatpush1.msra.mxu0 0.0
      %575 = vmatprep.subr.mxu0 0.0
      %576 = vmatpush1.msra.mxu0 0.0
      %577 = vmatprep.subr.mxu0 0.0
      %578 = vmatpush1.msra.mxu0 0.0
      %579 = vmatprep.subr.mxu0 0.0
      %580 = vmatpush1.msra.mxu0 0.0
      %581 = vmatprep.subr.mxu0 0.0
      %582 = vmatpush1.msra.mxu0 0.0
      %583 = vmatprep.subr.mxu0 0.0
      %584 = vmatpush1.msra.mxu0 0.0
      %585 = vmatprep.subr.mxu0 0.0
      %586 = vmatpush1.msra.mxu0 0.0
      %587 = vmatprep.subr.mxu0 0.0
      %588 = vmatpush1.msra.mxu0 0.0
      %589 = vmatprep.mubr.f32.mxu0 0.0
      %590 = vmatmul.mubr.f32.gmra.mrb[0].mxu0 %v520
      %v591 = vpop.f32.mrb[0].mxu0
      %v592 = vadd.f32 %v517, %v591
      %v593 = vpop.f32.mrb[0].mxu0
      %594 = vmatprep.mubr.f32.mxu0 0.0
      %595 = vmatmul.mubr.f32.gmra.mrb[0].mxu0 %v523
      %v596 = vpop.f32.mrb[0].mxu0
      %v597 = vadd.f32 %v517, %v596
      %v598 = vpop.f32.mrb[0].mxu0
      %599 = vdwg.mxu0
      %v600 = vmul.f32 %v592, %v592
      %v601 = vmul.f32 %v597, %v597
      %v602 = vsel %vm460, %v600, 0.0
      %603 = vadd.xlane.f32.xlu0 %v602
      %v604 = vpop.xlane.xlu0 %603
      %v605 = vsel %vm460, %v601, 0.0
      %606 = vadd.xlane.f32.xlu0 %v605
      %v607 = vpop.xlane.xlu0 %606
      %v608 = vrsqrt.pop %v604
      %v609 = vmul.f32 %v604, %v608
      %vm610 = vcmp.eq.f32.partialorder %v604, inf
      %v611 = vsel %vm610, %v604, %v609
      %vm612 = vcmp.eq.f32.partialorder %v604, 0.0
      %v613 = vand.u32 %v604, 2147483648
      %v614 = vsel %vm612, %v613, %v611
      %v615 = vrsqrt.pop %v607
      %v616 = vmul.f32 %v607, %v615
      %vm617 = vcmp.eq.f32.partialorder %v607, inf
      %v618 = vsel %vm617, %v607, %v616
      %vm619 = vcmp.eq.f32.partialorder %v607, 0.0
      %v620 = vand.u32 %v607, 2147483648
      %v621 = vsel %vm619, %v620, %v618
      %v622 = vmax.f32 %v614, 1e-12
      %v623 = vmax.f32 %v621, 1e-12
      %v624 = vrcp.pop %v622
      %v625 = vmul.f32 %v592, %v624
      %v626 = vrcp.pop %v623
      %v627 = vmul.f32 %v597, %v626
      %v628 = vld [vmem:[#allocation2] sm:$0xff]
      %v629 = vld [vmem:[#allocation2 + $0x8] sm:$0xff]
      %v630 = vadd.f32 %v628, %v625
      %v631 = vadd.f32 %v629, %v627
      %632 = vst.msk [vmem:[#allocation2] sm:$0xff] %vm460, %v630
      %633 = vst.msk [vmem:[#allocation2 + $0x8] sm:$0xff] %vm460, %v631
      %p634 = scmp.eq.s32.totalorder %s23, 1
      // Predicated region
      $region53: #{forward_db.1} parent=47 // pred_check
        %p635 = pneg %p634
      $region54: #{forward_db.1} parent=47 // pred_check_branch
        %637 = sbr.rel (%p635) target = $region56
      $region55: #{forward_db.1} parent=47 // pred_region
        %v638 = vld [vmem:[#allocation2] sm:$0xff]
        %v639 = vld [vmem:[#allocation2 + $0x8] sm:$0xff]
        %v640 = vmul.f32 %v638, 0.5
        %v641 = vmul.f32 %v639, 0.5
        %v642 = vmul.f32 %v640, %v640
        %v643 = vmul.f32 %v641, %v641
        %v644 = vsel %vm460, %v642, 0.0
        %645 = vadd.xlane.f32.xlu0 %v644
        %v646 = vpop.xlane.xlu0 %645
        %v647 = vsel %vm460, %v643, 0.0
        %648 = vadd.xlane.f32.xlu0 %v647
        %v649 = vpop.xlane.xlu0 %648
        %v650 = vrsqrt.pop %v646
        %v651 = vmul.f32 %v646, %v650
        %vm652 = vcmp.eq.f32.partialorder %v646, inf
        %v653 = vsel %vm652, %v646, %v651
        %vm654 = vcmp.eq.f32.partialorder %v646, 0.0
        %v655 = vand.u32 %v646, 2147483648
        %v656 = vsel %vm654, %v655, %v653
        %v657 = vrsqrt.pop %v649
        %v658 = vmul.f32 %v649, %v657
        %vm659 = vcmp.eq.f32.partialorder %v649, inf
        %v660 = vsel %vm659, %v649, %v658
        %vm661 = vcmp.eq.f32.partialorder %v649, 0.0
        %v662 = vand.u32 %v649, 2147483648
        %v663 = vsel %vm661, %v662, %v660
        %v664 = vmax.f32 %v656, 1e-12
        %v665 = vmax.f32 %v663, 1e-12
        %v666 = vrcp.pop %v664
        %v667 = vmul.f32 %v640, %v666
        %v668 = vrcp.pop %v665
        %v669 = vmul.f32 %v641, %v668
        %670 = vst.msk [vmem:[%s309] sm:$0xff] %vm460, %v667
        %671 = vst.msk [vmem:[%s309 + $0x8] sm:$0xff] %vm460, %v669
      $region56: #{forward_db.1} parent=47 // pred_fallthru
        _
      %s672 = smul.u32 2, %s22
      %p673 = scmp.lt.s32.totalorder %s672, 3
      %s674 = scalar_select %p673, %s672, 3
      %s675 = smul.addr %s674, 8
      %s676 = scalar_lea.vmem %s7, %s675
      // Predicated region
      $region57: #{forward_db.1} parent=47 // pred_check
        %p677 = pneg %p202
      $region58: #{forward_db.1} parent=47 // pred_check_branch
        %679 = sbr.rel (%p677) target = $region60
      $region59: #{forward_db.1} parent=47 // pred_region
        %s680 = smul.u32 2, %s22
      $region60: #{forward_db.1} parent=47 // pred_fallthru
        _
    $region48: #{forward_db.1} parent=5 // pred_fallthru
      _
    %p681 = scmp.le.s32.totalorder 2, %s13
    // Predicated region
    $region61: #{forward_db.1} parent=5 // pred_check
      %p682 = pneg %p681
    $region62: #{forward_db.1} parent=5 // pred_check_branch
      %684 = sbr.rel (%p682) target = $region64
    $region63: #{forward_db.1} parent=5 // pred_region
      %s685 = ssub.s32 %s13, 2
      // Predicated region
      $region65: #{forward_db.1} parent=63 // pred_check
        %p686 = pneg %p208
      $region66: #{forward_db.1} parent=63 // pred_check_branch
        %688 = sbr.rel (%p686) target = $region68
      $region67: #{forward_db.1} parent=63 // pred_region
        %s689 = smul.u32 2, %s24
        %p690 = scmp.lt.s32.totalorder %s689, 3
        %s691 = scalar_select %p690, %s689, 3
        %s692 = smul.addr %s691, 8
        %s693 = scalar_lea.vmem %s7, %s692
      $region68: #{forward_db.1} parent=63 // pred_fallthru
        _
    $region64: #{forward_db.1} parent=5 // pred_fallthru
      _
  $region6: #{forward_db.1} parent=0 // loop_footer
    %s17 = sadd.s32 1, %s13
  $region7: #{forward_db.1} parent=0 // loop_footer_branch
    %12 = sbr.rel target = $region3
  $region8: #{forward_db.1} parent=0 // loop_exit
    _

</llo_original>
